<compile_context>
chip_gen: v7x
topology: tpu7x:2x2x1
jax: 0.10.0
libtpu: 0.0.40
codegen_flags: <defaults>
</compile_context>

<pallas_src>
import functools

import jax
import jax.numpy as jnp
from jax.experimental import pallas as pl
from jax.experimental.pallas import tpu as pltpu


def _round_up(x, m):
    return (x + m - 1) // m * m


def se_fusion_kernel(rgb_ref, depth_ref, wb1_ref, wb2_ref, out_ref, *, inv_hw, block_b):
    """rgb/depth/out refs: (block_b, C, HW). wb1: (2, Cr, C+1). wb2: (2, C, Cr+1)."""
    wb1 = wb1_ref[...]                 # (2, Cr, C+1) f32 (tiny)
    wb2 = wb2_ref[...]                 # (2, C, Cr+1) f32 (tiny)
    cr = wb1.shape[1]
    c = wb1.shape[2] - 1
    w1 = (wb1[0, :, :c], wb1[1, :, :c])      # (Cr, C) per branch
    b1 = (wb1[0, :, c:], wb1[1, :, c:])      # (Cr, 1)
    w2 = (wb2[0, :, :cr], wb2[1, :, :cr])    # (C, Cr)
    b2 = (wb2[0, :, cr:], wb2[1, :, cr:])    # (C, 1)

    def channel_scale(x, branch):
        # squeeze: exact spatial mean in f32 (last dim is the true HW, so
        # sum * inv_hw is exact -- no padding lanes to worry about).
        pooled = jnp.sum(x, axis=-1, keepdims=True) * inv_hw            # (C, 1)
        # excitation: two tiny FCs (negligible next to the HBM stream).
        h = jnp.dot(w1[branch], pooled, preferred_element_type=jnp.float32) + b1[branch]
        h = jnp.maximum(h, 0.0)
        s = jnp.dot(w2[branch], h, preferred_element_type=jnp.float32) + b2[branch]
        return jax.nn.sigmoid(s)                                        # (C, 1)

    # Static unrolled loop over the batch rows grouped into this block.
    for b in range(block_b):
        rgb = rgb_ref[b].astype(jnp.float32)      # (C, HW)
        depth = depth_ref[b].astype(jnp.float32)  # (C, HW)
        s_rgb = channel_scale(rgb, 0)
        s_depth = channel_scale(depth, 1)
        # Fused channel re-weighting + fusion add: no full-size branch temporaries.
        out_ref[b] = (rgb * s_rgb + depth * s_depth).astype(out_ref.dtype)


def se_fusion(rgb, depth, params, *, batch_block=None):
    """SEFusion forward. rgb, depth: (B, C, H, W), same shape.

    Output dtype = (promoted) input dtype.  To halve HBM traffic, feed bf16
    activations directly (no wrapper-side cast is performed here on purpose).
    `batch_block` optionally caps how many batch images are grouped per step.
    """
    B, C, H, W = rgb.shape
    assert depth.shape == rgb.shape, "rgb and depth must have the same shape"
    HW = H * W
    out_dtype = jnp.promote_types(rgb.dtype, depth.dtype)

    # Free (layout-preserving) reshapes only -- no padding, no extra HBM passes.
    rgb2 = rgb.reshape(B, C, HW)
    depth2 = depth.reshape(B, C, HW)

    # Pack the 8 weight/bias tensors into 2 tiny slabs (branch-stacked, bias as
    # an extra column): wb1 = [w1 | b1], wb2 = [w2 | b2].
    Cr = params["w1_rgb"].shape[0]
    f32 = jnp.float32
    wb1 = jnp.stack(
        [jnp.concatenate([params["w1_rgb"], params["b1_rgb"]], axis=1),
         jnp.concatenate([params["w1_depth"], params["b1_depth"]], axis=1)],
        axis=0).astype(f32)                       # (2, Cr, C+1)
    wb2 = jnp.stack(
        [jnp.concatenate([params["w2_rgb"], params["b2_rgb"]], axis=1),
         jnp.concatenate([params["w2_depth"], params["b2_depth"]], axis=1)],
        axis=0).astype(f32)                       # (2, C, Cr+1)

    # --- VMEM budget (generation-aware: v5e/v6e 128 MiB, v7x 64 MiB) ---
    try:
        vmem_cap = int(pltpu.get_tpu_info().vmem_capacity_bytes)
    except Exception:
        vmem_cap = 64 << 20                       # conservative fallback (v7x)
    vmem_ceiling = int(vmem_cap * 0.85)           # headroom for compiler scratch

    itemsize = max(jnp.dtype(rgb2.dtype).itemsize,
                   jnp.dtype(depth2.dtype).itemsize,
                   jnp.dtype(out_dtype).itemsize)
    per_item = C * HW * itemsize                  # one activation stream, one image
    w_bytes = 2 * (2 * _round_up(Cr, 8) * _round_up(C + 1, 128) * 4
                   + 2 * _round_up(C, 8) * _round_up(Cr + 1, 128) * 4)
    work_bytes = 4 * C * HW * 4                   # in-kernel f32 row temporaries
    fixed = w_bytes + work_bytes + (2 << 20)      # + margin

    def fits(bt, bufs):
        return bufs * bt * per_item + fixed <= vmem_ceiling

    # Batch-group images per grid step to amortize ~0.35 us/step overhead on
    # small feature maps: target ~2 MiB per stream, cap unroll at 16, fit VMEM.
    cap = max(1, min(16, (2 << 20) // max(per_item, 1)))
    if batch_block is not None:
        cap = max(1, min(cap, int(batch_block)))
    while cap > 1 and not fits(cap, 6):
        cap -= 1
    bt = 1
    for d in range(1, B + 1):
        if B % d == 0 and d <= cap:
            bt = d
    steps = B // bt
    # TODO(synk): if even bt == 1 exceeds the VMEM ceiling (very large C*H*W,
    # mainly v7x's 64 MiB), switch to a two-sweep variant (pool pass, then a
    # channel-group-tiled apply pass); that also provides a second "parallel"
    # grid axis so both v7x TensorCores get work when B == 1.

    # Triple-buffer the two input streams on the 128 MiB chips (v5e/v6e) when
    # there is ample headroom and enough steps; keep depth 2 on v7x (VMEM-tight).
    use_buf3 = (vmem_cap >= (96 << 20) and steps >= 3
                and (8 * bt * per_item + fixed) <= vmem_ceiling // 2)
    bufs = 8 if use_buf3 else 6                   # (3+3+2) or (2+2+2) activation buffers
    needed = bufs * bt * per_item + fixed
    vmem_limit = None
    if needed > (16 << 20):                       # exceeds the smallest default scoped limit
        vmem_limit = int(min(needed, vmem_ceiling))

    idx = lambda g: (g, 0, 0)
    if use_buf3:
        act_in_spec = pl.BlockSpec((bt, C, HW), idx, pipeline_mode=pl.Buffered(3))
    else:
        act_in_spec = pl.BlockSpec((bt, C, HW), idx)
    act_out_spec = pl.BlockSpec((bt, C, HW), idx)
    wb1_spec = pl.BlockSpec((2, Cr, C + 1), lambda g: (0, 0, 0))
    wb2_spec = pl.BlockSpec((2, C, Cr + 1), lambda g: (0, 0, 0))

    cost = pl.CostEstimate(
        flops=int(3 * B * C * HW + 8 * B * Cr * C),
        transcendentals=int(2 * B * C),
        bytes_accessed=int(B * C * HW * (jnp.dtype(rgb2.dtype).itemsize
                                         + jnp.dtype(depth2.dtype).itemsize
                                         + jnp.dtype(out_dtype).itemsize)
                           + (wb1.size + wb2.size) * 4),
    )

    out = pl.pallas_call(
        functools.partial(se_fusion_kernel, inv_hw=float(1.0 / HW), block_b=bt),
        out_shape=jax.ShapeDtypeStruct((B, C, HW), out_dtype),
        grid_spec=pltpu.PrefetchScalarGridSpec(
            num_scalar_prefetch=0,
            grid=(steps,),
            in_specs=[act_in_spec, act_in_spec, wb1_spec, wb2_spec],
            out_specs=act_out_spec,
        ),
        compiler_params=pltpu.CompilerParams(
            dimension_semantics=("parallel",),
            vmem_limit_bytes=vmem_limit,
        ),
        cost_estimate=cost,
    )(rgb2, depth2, wb1, wb2)

    return out.reshape(B, C, H, W)


def se_fusion_reference(rgb, depth, params):
    """Pure-JAX reference mirroring the PyTorch forward (f32)."""
    def se(x, w1, b1, w2, b2):
        pooled = jnp.mean(x, axis=(2, 3), keepdims=True)          # (B,C,1,1)
        h = jnp.einsum("rc,bcij->brij", w1, pooled) + b1[None, :, :, None]
        h = jnp.maximum(h, 0.0)
        s = jnp.einsum("cr,brij->bcij", w2, h) + b2[None, :, :, None]
        s = jax.nn.sigmoid(s)
        return x * s
    r = se(rgb, params["w1_rgb"], params["b1_rgb"],
           params["w2_rgb"], params["b2_rgb"])
    d = se(depth, params["w1_depth"], params["b1_depth"],
           params["w2_depth"], params["b2_depth"])
    return r + d


def init_params(key, channels, reduction=16):
    Cr = channels // reduction
    assert Cr >= 1, "channels must be >= reduction"
    ks = jax.random.split(key, 8)
    def w(k, shape):
        return jax.random.normal(k, shape, jnp.float32) * 0.1
    return {
        # Conv2d(C, Cr, 1): weight (Cr, C, 1, 1) -> (Cr, C); bias (Cr,) -> (Cr, 1)
        "w1_rgb":   w(ks[0], (Cr, channels)),
        "b1_rgb":   w(ks[1], (Cr, 1)),
        # Conv2d(Cr, C, 1): weight (C, Cr, 1, 1) -> (C, Cr); bias (C,) -> (C, 1)
        "w2_rgb":   w(ks[2], (channels, Cr)),
        "b2_rgb":   w(ks[3], (channels, 1)),
        "w1_depth": w(ks[4], (Cr, channels)),
        "b1_depth": w(ks[5], (Cr, 1)),
        "w2_depth": w(ks[6], (channels, Cr)),
        "b2_depth": w(ks[7], (channels, 1)),
    }


if __name__ == "__main__":
    key = jax.random.PRNGKey(0)

    # --- test 1: f32, lane-aligned spatial (16x16 = 256) ---
    B, C, H, W = 2, 32, 16, 16          # C=32 so C//16 = 2 (valid SE bottleneck)
    k_rgb, k_depth, k_params = jax.random.split(key, 3)
    rgb = jax.random.normal(k_rgb, (B, C, H, W), jnp.float32)
    depth = jax.random.normal(k_depth, (B, C, H, W), jnp.float32)
    params = init_params(k_params, C, reduction=16)

    out = jax.block_until_ready(se_fusion(rgb, depth, params))
    ref = se_fusion_reference(rgb, depth, params)
    assert out.shape == (B, C, H, W)
    assert out.dtype == jnp.float32
    assert jnp.allclose(out, ref, atol=1e-5, rtol=1e-5), "f32 mismatch vs reference"

    # --- test 2: caller supplies bf16 activations directly (no wrapper cast) ---
    rgb_bf = rgb.astype(jnp.bfloat16)
    depth_bf = depth.astype(jnp.bfloat16)
    out_bf16 = jax.block_until_ready(se_fusion(rgb_bf, depth_bf, params))
    assert out_bf16.dtype == jnp.bfloat16
    ref_bf16 = se_fusion_reference(rgb_bf.astype(jnp.float32),
                                   depth_bf.astype(jnp.float32), params)
    assert jnp.allclose(out_bf16.astype(jnp.float32), ref_bf16,
                        atol=2e-2, rtol=2e-2), "bf16 mismatch vs reference"

    # --- test 3: non-multiple-of-128 spatial (7x7 = 49), unpadded full-extent block ---
    B2, H2, W2 = 3, 7, 7
    k2a, k2b = jax.random.split(jax.random.PRNGKey(1))
    rgb2 = jax.random.normal(k2a, (B2, C, H2, W2), jnp.float32)
    depth2 = jax.random.normal(k2b, (B2, C, H2, W2), jnp.float32)
    out2 = jax.block_until_ready(se_fusion(rgb2, depth2, params))
    ref2 = se_fusion_reference(rgb2, depth2, params)
    assert out2.shape == (B2, C, H2, W2)
    assert jnp.allclose(out2, ref2, atol=1e-5, rtol=1e-5), "unpadded mismatch vs reference"

    # --- test 4: multi-step grid with batch grouping (B=4, Bt=2 -> 2 steps) ---
    B3, H3, W3 = 4, 8, 8
    k3a, k3b = jax.random.split(jax.random.PRNGKey(2))
    rgb3 = jax.random.normal(k3a, (B3, C, H3, W3), jnp.float32)
    depth3 = jax.random.normal(k3b, (B3, C, H3, W3), jnp.float32)
    out3 = jax.block_until_ready(se_fusion(rgb3, depth3, params, batch_block=2))
    ref3 = se_fusion_reference(rgb3, depth3, params)
    assert out3.shape == (B3, C, H3, W3)
    assert jnp.allclose(out3, ref3, atol=1e-5, rtol=1e-5), "batched-block mismatch vs reference"

    print("KERNEL_OK")
</pallas_src>

<mosaic_0001>
module attributes {stable_mosaic.version = 11 : i64} {
  func.func @se_fusion_kernel(%arg0: i32, %arg1: memref<2x32x256xf32, #tpu.memory_space<vmem>>, %arg2: memref<2x32x256xf32, #tpu.memory_space<vmem>>, %arg3: memref<2x2x33xf32, #tpu.memory_space<vmem>>, %arg4: memref<2x32x3xf32, #tpu.memory_space<vmem>>, %arg5: memref<2x32x256xf32, #tpu.memory_space<vmem>>) attributes {dimension_semantics = [#tpu.dimension_semantics<parallel>], iteration_bounds = array<i64: 1>, scalar_prefetch = 0 : i64, scratch_operands = 0 : i64, tpu.core_type = #tpu.core_type<tc>, window_params = [{transform_indices = @transform_0, window_bounds = array<i64: 2, 32, 256>}, {transform_indices = @transform_1, window_bounds = array<i64: 2, 32, 256>}, {pipeline_mode = #tpu.pipeline_mode<synchronous>, transform_indices = @transform_2, window_bounds = array<i64: 2, 2, 33>}, {pipeline_mode = #tpu.pipeline_mode<synchronous>, transform_indices = @transform_3, window_bounds = array<i64: 2, 32, 3>}, {transform_indices = @transform_4, window_bounds = array<i64: 2, 32, 256>}]} {
    %c0 = arith.constant 0 : index
    %c0_0 = arith.constant 0 : index
    %c0_1 = arith.constant 0 : index
    %0 = vector.load %arg3[%c0, %c0_0, %c0_1] : memref<2x2x33xf32, #tpu.memory_space<vmem>>, vector<2x2x33xf32>
    %c0_2 = arith.constant 0 : index
    %c0_3 = arith.constant 0 : index
    %c0_4 = arith.constant 0 : index
    %1 = vector.load %arg4[%c0_2, %c0_3, %c0_4] : memref<2x32x3xf32, #tpu.memory_space<vmem>>, vector<2x32x3xf32>
    %2 = vector.extract_strided_slice %0 {offsets = [0, 0, 0], sizes = [1, 2, 32], strides = [1, 1, 1]} : vector<2x2x33xf32> to vector<1x2x32xf32>
    %3 = vector.shape_cast %2 : vector<1x2x32xf32> to vector<2x32xf32>
    %4 = vector.extract_strided_slice %0 {offsets = [1, 0, 0], sizes = [1, 2, 32], strides = [1, 1, 1]} : vector<2x2x33xf32> to vector<1x2x32xf32>
    %5 = vector.shape_cast %4 : vector<1x2x32xf32> to vector<2x32xf32>
    %6 = vector.extract_strided_slice %0 {offsets = [0, 0, 32], sizes = [1, 2, 1], strides = [1, 1, 1]} : vector<2x2x33xf32> to vector<1x2x1xf32>
    %7 = vector.shape_cast %6 : vector<1x2x1xf32> to vector<2x1xf32>
    %8 = vector.extract_strided_slice %0 {offsets = [1, 0, 32], sizes = [1, 2, 1], strides = [1, 1, 1]} : vector<2x2x33xf32> to vector<1x2x1xf32>
    %9 = vector.shape_cast %8 : vector<1x2x1xf32> to vector<2x1xf32>
    %10 = vector.extract_strided_slice %1 {offsets = [0, 0, 0], sizes = [1, 32, 2], strides = [1, 1, 1]} : vector<2x32x3xf32> to vector<1x32x2xf32>
    %11 = vector.shape_cast %10 : vector<1x32x2xf32> to vector<32x2xf32>
    %12 = vector.extract_strided_slice %1 {offsets = [1, 0, 0], sizes = [1, 32, 2], strides = [1, 1, 1]} : vector<2x32x3xf32> to vector<1x32x2xf32>
    %13 = vector.shape_cast %12 : vector<1x32x2xf32> to vector<32x2xf32>
    %14 = vector.extract_strided_slice %1 {offsets = [0, 0, 2], sizes = [1, 32, 1], strides = [1, 1, 1]} : vector<2x32x3xf32> to vector<1x32x1xf32>
    %15 = vector.shape_cast %14 : vector<1x32x1xf32> to vector<32x1xf32>
    %16 = vector.extract_strided_slice %1 {offsets = [1, 0, 2], sizes = [1, 32, 1], strides = [1, 1, 1]} : vector<2x32x3xf32> to vector<1x32x1xf32>
    %17 = vector.shape_cast %16 : vector<1x32x1xf32> to vector<32x1xf32>
    %c0_5 = arith.constant 0 : index
    %c0_6 = arith.constant 0 : index
    %c0_7 = arith.constant 0 : index
    %18 = vector.load %arg1[%c0_5, %c0_6, %c0_7] : memref<2x32x256xf32, #tpu.memory_space<vmem>>, vector<1x32x256xf32>
    %19 = vector.shape_cast %18 : vector<1x32x256xf32> to vector<32x256xf32>
    %c0_8 = arith.constant 0 : index
    %c0_9 = arith.constant 0 : index
    %c0_10 = arith.constant 0 : index
    %20 = vector.load %arg2[%c0_8, %c0_9, %c0_10] : memref<2x32x256xf32, #tpu.memory_space<vmem>>, vector<1x32x256xf32>
    %21 = vector.shape_cast %20 : vector<1x32x256xf32> to vector<32x256xf32>
    %cst = arith.constant dense<0.000000e+00> : vector<32xf32>
    %22 = vector.multi_reduction <add>, %19, %cst [1] : vector<32x256xf32> to vector<32xf32>
    %23 = vector.shape_cast %22 : vector<32xf32> to vector<32x1xf32>
    %cst_11 = arith.constant 3.906250e-03 : f32
    %24 = vector.broadcast %cst_11 : f32 to vector<32x1xf32>
    %25 = arith.mulf %23, %24 : vector<32x1xf32>
    %cst_12 = arith.constant dense<0.000000e+00> : vector<2x1xf32>
    %26 = tpu.matmul %3, %25, %cst_12 {dimension_numbers = #tpu.dot_dimension_numbers<[1], [0], [0], [1], [0, 0, 1, 1], [], []>} : vector<2x32xf32>, vector<32x1xf32>, vector<2x1xf32> -> vector<2x1xf32>
    %27 = arith.addf %26, %7 : vector<2x1xf32>
    %cst_13 = arith.constant 0.000000e+00 : f32
    %28 = vector.broadcast %cst_13 : f32 to vector<2x1xf32>
    %29 = arith.maximumf %27, %28 : vector<2x1xf32>
    %cst_14 = arith.constant dense<0.000000e+00> : vector<32x1xf32>
    %30 = tpu.matmul %11, %29, %cst_14 {dimension_numbers = #tpu.dot_dimension_numbers<[1], [0], [0], [1], [0, 0, 1, 1], [], []>} : vector<32x2xf32>, vector<2x1xf32>, vector<32x1xf32> -> vector<32x1xf32>
    %31 = arith.addf %30, %15 : vector<32x1xf32>
    %32 = arith.negf %31 : vector<32x1xf32>
    %33 = math.exp %32 : vector<32x1xf32>
    %cst_15 = arith.constant 1.000000e+00 : f32
    %34 = vector.broadcast %cst_15 : f32 to vector<32x1xf32>
    %35 = arith.addf %34, %33 : vector<32x1xf32>
    %36 = arith.divf %34, %35 : vector<32x1xf32>
    %cst_16 = arith.constant dense<0.000000e+00> : vector<32xf32>
    %37 = vector.multi_reduction <add>, %21, %cst_16 [1] : vector<32x256xf32> to vector<32xf32>
    %38 = vector.shape_cast %37 : vector<32xf32> to vector<32x1xf32>
    %cst_17 = arith.constant 3.906250e-03 : f32
    %39 = vector.broadcast %cst_17 : f32 to vector<32x1xf32>
    %40 = arith.mulf %38, %39 : vector<32x1xf32>
    %cst_18 = arith.constant dense<0.000000e+00> : vector<2x1xf32>
    %41 = tpu.matmul %5, %40, %cst_18 {dimension_numbers = #tpu.dot_dimension_numbers<[1], [0], [0], [1], [0, 0, 1, 1], [], []>} : vector<2x32xf32>, vector<32x1xf32>, vector<2x1xf32> -> vector<2x1xf32>
    %42 = arith.addf %41, %9 : vector<2x1xf32>
    %cst_19 = arith.constant 0.000000e+00 : f32
    %43 = vector.broadcast %cst_19 : f32 to vector<2x1xf32>
    %44 = arith.maximumf %42, %43 : vector<2x1xf32>
    %cst_20 = arith.constant dense<0.000000e+00> : vector<32x1xf32>
    %45 = tpu.matmul %13, %44, %cst_20 {dimension_numbers = #tpu.dot_dimension_numbers<[1], [0], [0], [1], [0, 0, 1, 1], [], []>} : vector<32x2xf32>, vector<2x1xf32>, vector<32x1xf32> -> vector<32x1xf32>
    %46 = arith.addf %45, %17 : vector<32x1xf32>
    %47 = arith.negf %46 : vector<32x1xf32>
    %48 = math.exp %47 : vector<32x1xf32>
    %cst_21 = arith.constant 1.000000e+00 : f32
    %49 = vector.broadcast %cst_21 : f32 to vector<32x1xf32>
    %50 = arith.addf %49, %48 : vector<32x1xf32>
    %51 = arith.divf %49, %50 : vector<32x1xf32>
    %52 = vector.broadcast %36 : vector<32x1xf32> to vector<32x256xf32>
    %53 = arith.mulf %19, %52 : vector<32x256xf32>
    %54 = vector.broadcast %51 : vector<32x1xf32> to vector<32x256xf32>
    %55 = arith.mulf %21, %54 : vector<32x256xf32>
    %56 = arith.addf %53, %55 : vector<32x256xf32>
    %c0_22 = arith.constant 0 : index
    %c0_23 = arith.constant 0 : index
    %c0_24 = arith.constant 0 : index
    %57 = vector.load %arg5[%c0_22, %c0_23, %c0_24] : memref<2x32x256xf32, #tpu.memory_space<vmem>>, vector<1x32x256xf32>
    %58 = vector.shape_cast %57 : vector<1x32x256xf32> to vector<32x256xf32>
    %59 = vector.shape_cast %56 : vector<32x256xf32> to vector<1x32x256xf32>
    tpu.vector_store %arg5[%c0_22, %c0_23, %c0_24], %59 {strides = array<i32>} : memref<2x32x256xf32, #tpu.memory_space<vmem>>, vector<1x32x256xf32>,
    %c1 = arith.constant 1 : index
    %c0_25 = arith.constant 0 : index
    %c0_26 = arith.constant 0 : index
    %60 = vector.load %arg1[%c1, %c0_25, %c0_26] : memref<2x32x256xf32, #tpu.memory_space<vmem>>, vector<1x32x256xf32>
    %61 = vector.shape_cast %60 : vector<1x32x256xf32> to vector<32x256xf32>
    %c1_27 = arith.constant 1 : index
    %c0_28 = arith.constant 0 : index
    %c0_29 = arith.constant 0 : index
    %62 = vector.load %arg2[%c1_27, %c0_28, %c0_29] : memref<2x32x256xf32, #tpu.memory_space<vmem>>, vector<1x32x256xf32>
    %63 = vector.shape_cast %62 : vector<1x32x256xf32> to vector<32x256xf32>
    %cst_30 = arith.constant dense<0.000000e+00> : vector<32xf32>
    %64 = vector.multi_reduction <add>, %61, %cst_30 [1] : vector<32x256xf32> to vector<32xf32>
    %65 = vector.shape_cast %64 : vector<32xf32> to vector<32x1xf32>
    %cst_31 = arith.constant 3.906250e-03 : f32
    %66 = vector.broadcast %cst_31 : f32 to vector<32x1xf32>
    %67 = arith.mulf %65, %66 : vector<32x1xf32>
    %cst_32 = arith.constant dense<0.000000e+00> : vector<2x1xf32>
    %68 = tpu.matmul %3, %67, %cst_32 {dimension_numbers = #tpu.dot_dimension_numbers<[1], [0], [0], [1], [0, 0, 1, 1], [], []>} : vector<2x32xf32>, vector<32x1xf32>, vector<2x1xf32> -> vector<2x1xf32>
    %69 = arith.addf %68, %7 : vector<2x1xf32>
    %cst_33 = arith.constant 0.000000e+00 : f32
    %70 = vector.broadcast %cst_33 : f32 to vector<2x1xf32>
    %71 = arith.maximumf %69, %70 : vector<2x1xf32>
    %cst_34 = arith.constant dense<0.000000e+00> : vector<32x1xf32>
    %72 = tpu.matmul %11, %71, %cst_34 {dimension_numbers = #tpu.dot_dimension_numbers<[1], [0], [0], [1], [0, 0, 1, 1], [], []>} : vector<32x2xf32>, vector<2x1xf32>, vector<32x1xf32> -> vector<32x1xf32>
    %73 = arith.addf %72, %15 : vector<32x1xf32>
    %74 = arith.negf %73 : vector<32x1xf32>
    %75 = math.exp %74 : vector<32x1xf32>
    %cst_35 = arith.constant 1.000000e+00 : f32
    %76 = vector.broadcast %cst_35 : f32 to vector<32x1xf32>
    %77 = arith.addf %76, %75 : vector<32x1xf32>
    %78 = arith.divf %76, %77 : vector<32x1xf32>
    %cst_36 = arith.constant dense<0.000000e+00> : vector<32xf32>
    %79 = vector.multi_reduction <add>, %63, %cst_36 [1] : vector<32x256xf32> to vector<32xf32>
    %80 = vector.shape_cast %79 : vector<32xf32> to vector<32x1xf32>
    %cst_37 = arith.constant 3.906250e-03 : f32
    %81 = vector.broadcast %cst_37 : f32 to vector<32x1xf32>
    %82 = arith.mulf %80, %81 : vector<32x1xf32>
    %cst_38 = arith.constant dense<0.000000e+00> : vector<2x1xf32>
    %83 = tpu.matmul %5, %82, %cst_38 {dimension_numbers = #tpu.dot_dimension_numbers<[1], [0], [0], [1], [0, 0, 1, 1], [], []>} : vector<2x32xf32>, vector<32x1xf32>, vector<2x1xf32> -> vector<2x1xf32>
    %84 = arith.addf %83, %9 : vector<2x1xf32>
    %cst_39 = arith.constant 0.000000e+00 : f32
    %85 = vector.broadcast %cst_39 : f32 to vector<2x1xf32>
    %86 = arith.maximumf %84, %85 : vector<2x1xf32>
    %cst_40 = arith.constant dense<0.000000e+00> : vector<32x1xf32>
    %87 = tpu.matmul %13, %86, %cst_40 {dimension_numbers = #tpu.dot_dimension_numbers<[1], [0], [0], [1], [0, 0, 1, 1], [], []>} : vector<32x2xf32>, vector<2x1xf32>, vector<32x1xf32> -> vector<32x1xf32>
    %88 = arith.addf %87, %17 : vector<32x1xf32>
    %89 = arith.negf %88 : vector<32x1xf32>
    %90 = math.exp %89 : vector<32x1xf32>
    %cst_41 = arith.constant 1.000000e+00 : f32
    %91 = vector.broadcast %cst_41 : f32 to vector<32x1xf32>
    %92 = arith.addf %91, %90 : vector<32x1xf32>
    %93 = arith.divf %91, %92 : vector<32x1xf32>
    %94 = vector.broadcast %78 : vector<32x1xf32> to vector<32x256xf32>
    %95 = arith.mulf %61, %94 : vector<32x256xf32>
    %96 = vector.broadcast %93 : vector<32x1xf32> to vector<32x256xf32>
    %97 = arith.mulf %63, %96 : vector<32x256xf32>
    %98 = arith.addf %95, %97 : vector<32x256xf32>
    %c1_42 = arith.constant 1 : index
    %c0_43 = arith.constant 0 : index
    %c0_44 = arith.constant 0 : index
    %99 = vector.load %arg5[%c1_42, %c0_43, %c0_44] : memref<2x32x256xf32, #tpu.memory_space<vmem>>, vector<1x32x256xf32>
    %100 = vector.shape_cast %99 : vector<1x32x256xf32> to vector<32x256xf32>
    %101 = vector.shape_cast %98 : vector<32x256xf32> to vector<1x32x256xf32>
    tpu.vector_store %arg5[%c1_42, %c0_43, %c0_44], %101 {strides = array<i32>} : memref<2x32x256xf32, #tpu.memory_space<vmem>>, vector<1x32x256xf32>,
    return
  }
  func.func @transform_0(%arg0: i32) -> (i32, i32, i32) {
    %c0_i32 = arith.constant 0 : i32
    %c0_i32_0 = arith.constant 0 : i32
    %c0_i32_1 = arith.constant 0 : i32
    return %arg0, %c0_i32, %c0_i32_0 : i32, i32, i32
  }
  func.func @transform_1(%arg0: i32) -> (i32, i32, i32) {
    %c0_i32 = arith.constant 0 : i32
    %c0_i32_0 = arith.constant 0 : i32
    %c0_i32_1 = arith.constant 0 : i32
    return %arg0, %c0_i32, %c0_i32_0 : i32, i32, i32
  }
  func.func @transform_2(%arg0: i32) -> (i32, i32, i32) {
    %c0_i32 = arith.constant 0 : i32
    %c0_i32_0 = arith.constant 0 : i32
    %c0_i32_1 = arith.constant 0 : i32
    %c0_i32_2 = arith.constant 0 : i32
    return %c0_i32, %c0_i32_0, %c0_i32_1 : i32, i32, i32
  }
  func.func @transform_3(%arg0: i32) -> (i32, i32, i32) {
    %c0_i32 = arith.constant 0 : i32
    %c0_i32_0 = arith.constant 0 : i32
    %c0_i32_1 = arith.constant 0 : i32
    %c0_i32_2 = arith.constant 0 : i32
    return %c0_i32, %c0_i32_0, %c0_i32_1 : i32, i32, i32
  }
  func.func @transform_4(%arg0: i32) -> (i32, i32, i32) {
    %c0_i32 = arith.constant 0 : i32
    %c0_i32_0 = arith.constant 0 : i32
    %c0_i32_1 = arith.constant 0 : i32
    return %arg0, %c0_i32, %c0_i32_0 : i32, i32, i32
  }
}

</mosaic_0001>

<llo_original>
// kernel: tpu_custom_call.1
$region0: #{tpu_custom_call.1}
  #allocation0 [shape = 'u32[]', space=smem, size = 0x4, offset = 0x4, fixed_abs, tag = 'smem constant byte address 0x4 - core index']
  #allocation1 [shape = 'u32[144,128]{1,0:T(1,128)}', space=vmem, size = 0x12000, scoped, tag = 'internal scratch']
  %s0 = inlined_call_operand.hbm [shape: f32[2,32,256], index: 0, kind: input, shape index: {}]
  %s1 = inlined_call_operand.hbm [shape: f32[2,32,256], index: 1, kind: input, shape index: {}]
  %s2 = inlined_call_operand.vmem [shape: f32[2,2,33], index: 2, kind: input, shape index: {}]
  %s3 = inlined_call_operand.vmem [shape: f32[2,32,3], index: 3, kind: input, shape index: {}]
  %s4 = inlined_call_operand.hbm [shape: f32[2,32,256], index: 4, kind: output, shape index: {}]
  %s5 = sld [smem:[#allocation0]]
  $region34: #{tpu_custom_call.1} parent=0
    _
  %s7 = ssub.s32 1, %s5
  %s8 = scalar_select 0, %s7, %s5
  $region1: #{tpu_custom_call.1} parent=0
    #allocation2 [shape = 'u8[65536]{0}', space=vmem, size = 0x10000, scoped, tag = 'input window, operand 0, single buffered']
    #allocation3 [shape = 's32[1]{0}', space=sflag, size = 0x4, scoped, tag = 'scoped memory for tpu_custom_call.1']
    #allocation4 [shape = 's32[1]{0}', space=sflag, size = 0x4, scoped, tag = 'scoped memory for tpu_custom_call.1']
    #allocation5 [shape = 'u8[65536]{0}', space=vmem, size = 0x10000, scoped, tag = 'input window, operand 1, single buffered']
    #allocation6 [shape = 's32[1]{0}', space=sflag, size = 0x4, scoped, tag = 'scoped memory for tpu_custom_call.1']
    #allocation7 [shape = 'u8[65536]{0}', space=vmem, size = 0x10000, scoped, tag = 'output window, operand 0, single buffered']
    %9 = vsyncpa [#allocation3], 0
    %10 = vsyncpa [#allocation6], 0
    %11 = vsyncpa [#allocation4], 0
    // Predicated region
    $region2: #{tpu_custom_call.1} parent=1 // pred_check
      _
    $region3: #{tpu_custom_call.1} parent=1 // pred_check_branch
      %13 = sbr.rel (0) target = $region5
    $region4: #{tpu_custom_call.1} parent=1 // pred_region
      %s15 = ssub.s32 2048, 2048
      %16 = vsyncadd [#allocation3], %s15
      %s17 = sshll.u32 [#allocation2], 4
      %s18 = int_to_ptr.vmem [resolvable:$true] %s17
      %23 = dma.hbm_to_vmem [thread:$0]  %s0, 2048, %s18, [#allocation3], 256, 256, 16
    $region5: #{tpu_custom_call.1} parent=1 // pred_fallthru
      _
    // Predicated region
    $region6: #{tpu_custom_call.1} parent=1 // pred_check
      _
    $region7: #{tpu_custom_call.1} parent=1 // pred_check_branch
      %25 = sbr.rel (0) target = $region9
    $region8: #{tpu_custom_call.1} parent=1 // pred_region
      %s27 = ssub.s32 2048, 2048
      %28 = vsyncadd [#allocation6], %s27
      %s29 = sshll.u32 [#allocation5], 4
      %s30 = int_to_ptr.vmem [resolvable:$true] %s29
      %35 = dma.hbm_to_vmem [thread:$0]  %s1, 2048, %s30, [#allocation6], 256, 256, 16
    $region9: #{tpu_custom_call.1} parent=1 // pred_fallthru
      _
    // Predicated region
    $region10: #{tpu_custom_call.1} parent=1 // pred_check
      _
    $region11: #{tpu_custom_call.1} parent=1 // pred_check_branch
      %37 = sbr.rel (0) target = $region13
    $region12: #{tpu_custom_call.1} parent=1 // pred_region
      _
    $region13: #{tpu_custom_call.1} parent=1 // pred_fallthru
      _
    // Predicated region
    $region14: #{tpu_custom_call.1} parent=1 // pred_check
      _
    $region15: #{tpu_custom_call.1} parent=1 // pred_check_branch
      %39 = sbr.rel (0) target = $region17
    $region16: #{tpu_custom_call.1} parent=1 // pred_region
      _
    $region17: #{tpu_custom_call.1} parent=1 // pred_fallthru
      _
    // Predicated region
    $region18: #{tpu_custom_call.1} parent=1 // pred_check
      _
    $region19: #{tpu_custom_call.1} parent=1 // pred_check_branch
      %41 = sbr.rel (0) target = $region21
    $region20: #{tpu_custom_call.1} parent=1 // pred_region
      %42 = dma.done [#allocation3], 2048
    $region21: #{tpu_custom_call.1} parent=1 // pred_fallthru
      _
    // Predicated region
    $region22: #{tpu_custom_call.1} parent=1 // pred_check
      _
    $region23: #{tpu_custom_call.1} parent=1 // pred_check_branch
      %44 = sbr.rel (0) target = $region25
    $region24: #{tpu_custom_call.1} parent=1 // pred_region
      %45 = dma.done [#allocation6], 2048
    $region25: #{tpu_custom_call.1} parent=1 // pred_fallthru
      _
    %v46 = vld [vmem:[%s2] sm:$0x3]
    %v47 = vld [vmem:[%s2 + $0x2] sm:$0x3]
    %v48 = vld [vmem:[%s3] sm:$0xff]
    %v49 = vld [vmem:[%s3 + $0x8] sm:$0xff]
    %v50 = vld [vmem:[%s3 + $0x10] sm:$0xff]
    %v51 = vld [vmem:[%s3 + $0x18] sm:$0xff]
    %v52 = vld [vmem:[%s3 + $0x20] sm:$0xff]
    %v53 = vld [vmem:[%s3 + $0x28] sm:$0xff]
    %v54 = vld [vmem:[%s3 + $0x30] sm:$0xff]
    %v55 = vld [vmem:[%s3 + $0x38] sm:$0xff]
    %v56 = vld [vmem:[#allocation2] sm:$0xff]
    %v57 = vld [vmem:[#allocation2 + $0x8] sm:$0xff]
    %v58 = vld [vmem:[#allocation2 + $0x10] sm:$0xff]
    %v59 = vld [vmem:[#allocation2 + $0x18] sm:$0xff]
    %v60 = vld [vmem:[#allocation2 + $0x20] sm:$0xff]
    %v61 = vld [vmem:[#allocation2 + $0x28] sm:$0xff]
    %v62 = vld [vmem:[#allocation2 + $0x30] sm:$0xff]
    %v63 = vld [vmem:[#allocation2 + $0x38] sm:$0xff]
    %v64 = vld [vmem:[#allocation5] sm:$0xff]
    %v65 = vld [vmem:[#allocation5 + $0x8] sm:$0xff]
    %v66 = vld [vmem:[#allocation5 + $0x10] sm:$0xff]
    %v67 = vld [vmem:[#allocation5 + $0x18] sm:$0xff]
    %v68 = vld [vmem:[#allocation5 + $0x20] sm:$0xff]
    %v69 = vld [vmem:[#allocation5 + $0x28] sm:$0xff]
    %v70 = vld [vmem:[#allocation5 + $0x30] sm:$0xff]
    %v71 = vld [vmem:[#allocation5 + $0x38] sm:$0xff]
    %v72 = vadd.f32 %v56, %v57
    %73 = vadd.xlane.f32.xlu0 %v72
    %v74 = vpop.xlane.xlu0 %73
    %v75 = vadd.f32 %v58, %v59
    %76 = vadd.xlane.f32.xlu0 %v75
    %v77 = vpop.xlane.xlu0 %76
    %v78 = vadd.f32 %v60, %v61
    %79 = vadd.xlane.f32.xlu0 %v78
    %v80 = vpop.xlane.xlu0 %79
    %v81 = vadd.f32 %v62, %v63
    %82 = vadd.xlane.f32.xlu0 %v81
    %v83 = vpop.xlane.xlu0 %82
    %v84 = vmul.f32 %v74, 0.00390625
    %v85 = vmul.f32 %v77, 0.00390625
    %v86 = vmul.f32 %v80, 0.00390625
    %v87 = vmul.f32 %v83, 0.00390625
    %89 = vrot.lane.b32.xlu0 %v46, 96
    %v90 = vpop.permute.xlu0 %89
    %vm92 = vcmask 261120
    %v93 = vsel %vm92, %v46, 0
    %95 = vmatprep.subr.mxu0 0.0
    %96 = vmatpush1.msra.mxu0 %v84
    %97 = vmatprep.subr.mxu0 0.0
    %98 = vmatpush1.msra.mxu0 %v85
    %99 = vmatprep.subr.mxu0 0.0
    %100 = vmatpush1.msra.mxu0 %v86
    %101 = vmatprep.subr.mxu0 0.0
    %102 = vmatpush1.msra.mxu0 %v87
    %103 = vmatprep.subr.mxu0 0.0
    %104 = vmatpush1.msra.mxu0 0.0
    %105 = vmatprep.subr.mxu0 0.0
    %106 = vmatpush1.msra.mxu0 0.0
    %107 = vmatprep.subr.mxu0 0.0
    %108 = vmatpush1.msra.mxu0 0.0
    %109 = vmatprep.subr.mxu0 0.0
    %110 = vmatpush1.msra.mxu0 0.0
    %111 = vmatprep.subr.mxu0 0.0
    %112 = vmatpush1.msra.mxu0 0.0
    %113 = vmatprep.subr.mxu0 0.0
    %114 = vmatpush1.msra.mxu0 0.0
    %115 = vmatprep.subr.mxu0 0.0
    %116 = vmatpush1.msra.mxu0 0.0
    %117 = vmatprep.subr.mxu0 0.0
    %118 = vmatpush1.msra.mxu0 0.0
    %119 = vmatprep.subr.mxu0 0.0
    %120 = vmatpush1.msra.mxu0 0.0
    %121 = vmatprep.subr.mxu0 0.0
    %122 = vmatpush1.msra.mxu0 0.0
    %123 = vmatprep.subr.mxu0 0.0
    %124 = vmatpush1.msra.mxu0 0.0
    %125 = vmatprep.subr.mxu0 0.0
    %126 = vmatpush1.msra.mxu0 0.0
    %127 = vmatprep.subr.mxu0 0.0
    %128 = vmatpush1.msra.mxu0 0.0
    %129 = vmatprep.subr.mxu0 0.0
    %130 = vmatpush1.msra.mxu0 0.0
    %131 = vmatprep.subr.mxu0 0.0
    %132 = vmatpush1.msra.mxu0 0.0
    %133 = vmatprep.subr.mxu0 0.0
    %134 = vmatpush1.msra.mxu0 0.0
    %135 = vmatprep.subr.mxu0 0.0
    %136 = vmatpush1.msra.mxu0 0.0
    %137 = vmatprep.subr.mxu0 0.0
    %138 = vmatpush1.msra.mxu0 0.0
    %139 = vmatprep.subr.mxu0 0.0
    %140 = vmatpush1.msra.mxu0 0.0
    %141 = vmatprep.subr.mxu0 0.0
    %142 = vmatpush1.msra.mxu0 0.0
    %143 = vmatprep.subr.mxu0 0.0
    %144 = vmatpush1.msra.mxu0 0.0
    %145 = vmatprep.subr.mxu0 0.0
    %146 = vmatpush1.msra.mxu0 0.0
    %147 = vmatprep.subr.mxu0 0.0
    %148 = vmatpush1.msra.mxu0 0.0
    %149 = vmatprep.subr.mxu0 0.0
    %150 = vmatpush1.msra.mxu0 0.0
    %151 = vmatprep.subr.mxu0 0.0
    %152 = vmatpush1.msra.mxu0 0.0
    %153 = vmatprep.subr.mxu0 0.0
    %154 = vmatpush1.msra.mxu0 0.0
    %155 = vmatprep.subr.mxu0 0.0
    %156 = vmatpush1.msra.mxu0 0.0
    %157 = vmatprep.subr.mxu0 0.0
    %158 = vmatpush1.msra.mxu0 0.0
    %159 = vmatprep.mubr.f32.mxu0 0.0
    %160 = vmatmul.mubr.f32.gmra.mrb[0].mxu0 %v93
    %v161 = vpop.f32.mrb[0].mxu0
    %v162 = vadd.f32 %v90, %v161
    %v163 = vpop.f32.mrb[0].mxu0
    %164 = vdwg.mxu0
    %v165 = vmax.f32 %v162, 0.0
    %170 = vrot.lane.b32.xlu0 %v48, 126
    %v171 = vpop.permute.xlu0 %170
    %172 = vrot.lane.b32.xlu0 %v49, 126
    %v173 = vpop.permute.xlu0 %172
    %174 = vrot.lane.b32.xlu0 %v50, 126
    %v175 = vpop.permute.xlu0 %174
    %176 = vrot.lane.b32.xlu0 %v51, 126
    %v177 = vpop.permute.xlu0 %176
    %vm182 = vcmask 15360
    %v183 = vsel %vm182, %v48, 0
    %v185 = vsel %vm182, %v49, 0
    %v187 = vsel %vm182, %v50, 0
    %v189 = vsel %vm182, %v51, 0
    %vm191 = vcmask 1041408
    %v193 = vsel %vm191, %v165, 0
    %195 = vmatprep.subr.mxu0 0.0
    %196 = vmatpush1.msra.mxu0 %v193
    %197 = vmatprep.subr.mxu0 0.0
    %198 = vmatpush1.msra.mxu0 0.0
    %199 = vmatprep.subr.mxu0 0.0
    %200 = vmatpush1.msra.mxu0 0.0
    %201 = vmatprep.subr.mxu0 0.0
    %202 = vmatpush1.msra.mxu0 0.0
    %203 = vmatprep.subr.mxu0 0.0
    %204 = vmatpush1.msra.mxu0 0.0
    %205 = vmatprep.subr.mxu0 0.0
    %206 = vmatpush1.msra.mxu0 0.0
    %207 = vmatprep.subr.mxu0 0.0
    %208 = vmatpush1.msra.mxu0 0.0
    %209 = vmatprep.subr.mxu0 0.0
    %210 = vmatpush1.msra.mxu0 0.0
    %211 = vmatprep.subr.mxu0 0.0
    %212 = vmatpush1.msra.mxu0 0.0
    %213 = vmatprep.subr.mxu0 0.0
    %214 = vmatpush1.msra.mxu0 0.0
    %215 = vmatprep.subr.mxu0 0.0
    %216 = vmatpush1.msra.mxu0 0.0
    %217 = vmatprep.subr.mxu0 0.0
    %218 = vmatpush1.msra.mxu0 0.0
    %219 = vmatprep.subr.mxu0 0.0
    %220 = vmatpush1.msra.mxu0 0.0
    %221 = vmatprep.subr.mxu0 0.0
    %222 = vmatpush1.msra.mxu0 0.0
    %223 = vmatprep.subr.mxu0 0.0
    %224 = vmatpush1.msra.mxu0 0.0
    %225 = vmatprep.subr.mxu0 0.0
    %226 = vmatpush1.msra.mxu0 0.0
    %227 = vmatprep.subr.mxu0 0.0
    %228 = vmatpush1.msra.mxu0 0.0
    %229 = vmatprep.subr.mxu0 0.0
    %230 = vmatpush1.msra.mxu0 0.0
    %231 = vmatprep.subr.mxu0 0.0
    %232 = vmatpush1.msra.mxu0 0.0
    %233 = vmatprep.subr.mxu0 0.0
    %234 = vmatpush1.msra.mxu0 0.0
    %235 = vmatprep.subr.mxu0 0.0
    %236 = vmatpush1.msra.mxu0 0.0
    %237 = vmatprep.subr.mxu0 0.0
    %238 = vmatpush1.msra.mxu0 0.0
    %239 = vmatprep.subr.mxu0 0.0
    %240 = vmatpush1.msra.mxu0 0.0
    %241 = vmatprep.subr.mxu0 0.0
    %242 = vmatpush1.msra.mxu0 0.0
    %243 = vmatprep.subr.mxu0 0.0
    %244 = vmatpush1.msra.mxu0 0.0
    %245 = vmatprep.subr.mxu0 0.0
    %246 = vmatpush1.msra.mxu0 0.0
    %247 = vmatprep.subr.mxu0 0.0
    %248 = vmatpush1.msra.mxu0 0.0
    %249 = vmatprep.subr.mxu0 0.0
    %250 = vmatpush1.msra.mxu0 0.0
    %251 = vmatprep.subr.mxu0 0.0
    %252 = vmatpush1.msra.mxu0 0.0
    %253 = vmatprep.subr.mxu0 0.0
    %254 = vmatpush1.msra.mxu0 0.0
    %255 = vmatprep.subr.mxu0 0.0
    %256 = vmatpush1.msra.mxu0 0.0
    %257 = vmatprep.subr.mxu0 0.0
    %258 = vmatpush1.msra.mxu0 0.0
    %259 = vmatprep.mubr.f32.mxu0 0.0
    %260 = vmatmul.mubr.f32.gmra.mrb[0].mxu0 %v183
    %v261 = vpop.f32.mrb[0].mxu0
    %v262 = vadd.f32 %v171, %v261
    %v263 = vpop.f32.mrb[0].mxu0
    %264 = vmatprep.mubr.f32.mxu0 0.0
    %265 = vmatmul.mubr.f32.gmra.mrb[0].mxu0 %v185
    %v266 = vpop.f32.mrb[0].mxu0
    %v267 = vadd.f32 %v173, %v266
    %v268 = vpop.f32.mrb[0].mxu0
    %269 = vmatprep.mubr.f32.mxu0 0.0
    %270 = vmatmul.mubr.f32.gmra.mrb[0].mxu0 %v187
    %v271 = vpop.f32.mrb[0].mxu0
    %v272 = vadd.f32 %v175, %v271
    %v273 = vpop.f32.mrb[0].mxu0
    %274 = vmatprep.mubr.f32.mxu0 0.0
    %275 = vmatmul.mubr.f32.gmra.mrb[0].mxu0 %v189
    %v276 = vpop.f32.mrb[0].mxu0
    %v277 = vadd.f32 %v177, %v276
    %v278 = vpop.f32.mrb[0].mxu0
    %279 = vdwg.mxu0
    %v280 = vxor.u32 %v262, 2147483648
    %v281 = vxor.u32 %v267, 2147483648
    %v282 = vxor.u32 %v272, 2147483648
    %v283 = vxor.u32 %v277, 2147483648
    %v284 = vmul.f32 %v280, 1.442695
    %v285 = vpow.pop %v284
    %v286 = vmul.f32 %v281, 1.442695
    %v287 = vpow.pop %v286
    %v288 = vmul.f32 %v282, 1.442695
    %v289 = vpow.pop %v288
    %v290 = vmul.f32 %v283, 1.442695
    %v291 = vpow.pop %v290
    %v292 = vadd.f32 %v285, 1.0
    %v293 = vadd.f32 %v287, 1.0
    %v294 = vadd.f32 %v289, 1.0
    %v295 = vadd.f32 %v291, 1.0
    %v296 = vrcp.pop %v292
    %v297 = vmul.f32 1.0, %v296
    %v298 = vrcp.pop %v293
    %v299 = vmul.f32 1.0, %v298
    %v300 = vrcp.pop %v294
    %v301 = vmul.f32 1.0, %v300
    %v302 = vrcp.pop %v295
    %v303 = vmul.f32 1.0, %v302
    %v304 = vadd.f32 %v64, %v65
    %305 = vadd.xlane.f32.xlu0 %v304
    %v306 = vpop.xlane.xlu0 %305
    %v307 = vadd.f32 %v66, %v67
    %308 = vadd.xlane.f32.xlu0 %v307
    %v309 = vpop.xlane.xlu0 %308
    %v310 = vadd.f32 %v68, %v69
    %311 = vadd.xlane.f32.xlu0 %v310
    %v312 = vpop.xlane.xlu0 %311
    %v313 = vadd.f32 %v70, %v71
    %314 = vadd.xlane.f32.xlu0 %v313
    %v315 = vpop.xlane.xlu0 %314
    %v316 = vmul.f32 %v306, 0.00390625
    %v317 = vmul.f32 %v309, 0.00390625
    %v318 = vmul.f32 %v312, 0.00390625
    %v319 = vmul.f32 %v315, 0.00390625
    %321 = vrot.lane.b32.xlu0 %v47, 96
    %v322 = vpop.permute.xlu0 %321
    %v324 = vsel %vm92, %v47, 0
    %326 = vmatprep.subr.mxu0 0.0
    %327 = vmatpush1.msra.mxu0 %v316
    %328 = vmatprep.subr.mxu0 0.0
    %329 = vmatpush1.msra.mxu0 %v317
    %330 = vmatprep.subr.mxu0 0.0
    %331 = vmatpush1.msra.mxu0 %v318
    %332 = vmatprep.subr.mxu0 0.0
    %333 = vmatpush1.msra.mxu0 %v319
    %334 = vmatprep.subr.mxu0 0.0
    %335 = vmatpush1.msra.mxu0 0.0
    %336 = vmatprep.subr.mxu0 0.0
    %337 = vmatpush1.msra.mxu0 0.0
    %338 = vmatprep.subr.mxu0 0.0
    %339 = vmatpush1.msra.mxu0 0.0
    %340 = vmatprep.subr.mxu0 0.0
    %341 = vmatpush1.msra.mxu0 0.0
    %342 = vmatprep.subr.mxu0 0.0
    %343 = vmatpush1.msra.mxu0 0.0
    %344 = vmatprep.subr.mxu0 0.0
    %345 = vmatpush1.msra.mxu0 0.0
    %346 = vmatprep.subr.mxu0 0.0
    %347 = vmatpush1.msra.mxu0 0.0
    %348 = vmatprep.subr.mxu0 0.0
    %349 = vmatpush1.msra.mxu0 0.0
    %350 = vmatprep.subr.mxu0 0.0
    %351 = vmatpush1.msra.mxu0 0.0
    %352 = vmatprep.subr.mxu0 0.0
    %353 = vmatpush1.msra.mxu0 0.0
    %354 = vmatprep.subr.mxu0 0.0
    %355 = vmatpush1.msra.mxu0 0.0
    %356 = vmatprep.subr.mxu0 0.0
    %357 = vmatpush1.msra.mxu0 0.0
    %358 = vmatprep.subr.mxu0 0.0
    %359 = vmatpush1.msra.mxu0 0.0
    %360 = vmatprep.subr.mxu0 0.0
    %361 = vmatpush1.msra.mxu0 0.0
    %362 = vmatprep.subr.mxu0 0.0
    %363 = vmatpush1.msra.mxu0 0.0
    %364 = vmatprep.subr.mxu0 0.0
    %365 = vmatpush1.msra.mxu0 0.0
    %366 = vmatprep.subr.mxu0 0.0
    %367 = vmatpush1.msra.mxu0 0.0
    %368 = vmatprep.subr.mxu0 0.0
    %369 = vmatpush1.msra.mxu0 0.0
    %370 = vmatprep.subr.mxu0 0.0
    %371 = vmatpush1.msra.mxu0 0.0
    %372 = vmatprep.subr.mxu0 0.0
    %373 = vmatpush1.msra.mxu0 0.0
    %374 = vmatprep.subr.mxu0 0.0
    %375 = vmatpush1.msra.mxu0 0.0
    %376 = vmatprep.subr.mxu0 0.0
    %377 = vmatpush1.msra.mxu0 0.0
    %378 = vmatprep.subr.mxu0 0.0
    %379 = vmatpush1.msra.mxu0 0.0
    %380 = vmatprep.subr.mxu0 0.0
    %381 = vmatpush1.msra.mxu0 0.0
    %382 = vmatprep.subr.mxu0 0.0
    %383 = vmatpush1.msra.mxu0 0.0
    %384 = vmatprep.subr.mxu0 0.0
    %385 = vmatpush1.msra.mxu0 0.0
    %386 = vmatprep.subr.mxu0 0.0
    %387 = vmatpush1.msra.mxu0 0.0
    %388 = vmatprep.subr.mxu0 0.0
    %389 = vmatpush1.msra.mxu0 0.0
    %390 = vmatprep.mubr.f32.mxu0 0.0
    %391 = vmatmul.mubr.f32.gmra.mrb[0].mxu0 %v324
    %v392 = vpop.f32.mrb[0].mxu0
    %v393 = vadd.f32 %v322, %v392
    %v394 = vpop.f32.mrb[0].mxu0
    %395 = vdwg.mxu0
    %v396 = vmax.f32 %v393, 0.0
    %401 = vrot.lane.b32.xlu0 %v52, 126
    %v402 = vpop.permute.xlu0 %401
    %403 = vrot.lane.b32.xlu0 %v53, 126
    %v404 = vpop.permute.xlu0 %403
    %405 = vrot.lane.b32.xlu0 %v54, 126
    %v406 = vpop.permute.xlu0 %405
    %407 = vrot.lane.b32.xlu0 %v55, 126
    %v408 = vpop.permute.xlu0 %407
    %v413 = vsel %vm182, %v52, 0
    %v415 = vsel %vm182, %v53, 0
    %v417 = vsel %vm182, %v54, 0
    %v419 = vsel %vm182, %v55, 0
    %v422 = vsel %vm191, %v396, 0
    %424 = vmatprep.subr.mxu0 0.0
    %425 = vmatpush1.msra.mxu0 %v422
    %426 = vmatprep.subr.mxu0 0.0
    %427 = vmatpush1.msra.mxu0 0.0
    %428 = vmatprep.subr.mxu0 0.0
    %429 = vmatpush1.msra.mxu0 0.0
    %430 = vmatprep.subr.mxu0 0.0
    %431 = vmatpush1.msra.mxu0 0.0
    %432 = vmatprep.subr.mxu0 0.0
    %433 = vmatpush1.msra.mxu0 0.0
    %434 = vmatprep.subr.mxu0 0.0
    %435 = vmatpush1.msra.mxu0 0.0
    %436 = vmatprep.subr.mxu0 0.0
    %437 = vmatpush1.msra.mxu0 0.0
    %438 = vmatprep.subr.mxu0 0.0
    %439 = vmatpush1.msra.mxu0 0.0
    %440 = vmatprep.subr.mxu0 0.0
    %441 = vmatpush1.msra.mxu0 0.0
    %442 = vmatprep.subr.mxu0 0.0
    %443 = vmatpush1.msra.mxu0 0.0
    %444 = vmatprep.subr.mxu0 0.0
    %445 = vmatpush1.msra.mxu0 0.0
    %446 = vmatprep.subr.mxu0 0.0
    %447 = vmatpush1.msra.mxu0 0.0
    %448 = vmatprep.subr.mxu0 0.0
    %449 = vmatpush1.msra.mxu0 0.0
    %450 = vmatprep.subr.mxu0 0.0
    %451 = vmatpush1.msra.mxu0 0.0
    %452 = vmatprep.subr.mxu0 0.0
    %453 = vmatpush1.msra.mxu0 0.0
    %454 = vmatprep.subr.mxu0 0.0
    %455 = vmatpush1.msra.mxu0 0.0
    %456 = vmatprep.subr.mxu0 0.0
    %457 = vmatpush1.msra.mxu0 0.0
    %458 = vmatprep.subr.mxu0 0.0
    %459 = vmatpush1.msra.mxu0 0.0
    %460 = vmatprep.subr.mxu0 0.0
    %461 = vmatpush1.msra.mxu0 0.0
    %462 = vmatprep.subr.mxu0 0.0
    %463 = vmatpush1.msra.mxu0 0.0
    %464 = vmatprep.subr.mxu0 0.0
    %465 = vmatpush1.msra.mxu0 0.0
    %466 = vmatprep.subr.mxu0 0.0
    %467 = vmatpush1.msra.mxu0 0.0
    %468 = vmatprep.subr.mxu0 0.0
    %469 = vmatpush1.msra.mxu0 0.0
    %470 = vmatprep.subr.mxu0 0.0
    %471 = vmatpush1.msra.mxu0 0.0
    %472 = vmatprep.subr.mxu0 0.0
    %473 = vmatpush1.msra.mxu0 0.0
    %474 = vmatprep.subr.mxu0 0.0
    %475 = vmatpush1.msra.mxu0 0.0
    %476 = vmatprep.subr.mxu0 0.0
    %477 = vmatpush1.msra.mxu0 0.0
    %478 = vmatprep.subr.mxu0 0.0
    %479 = vmatpush1.msra.mxu0 0.0
    %480 = vmatprep.subr.mxu0 0.0
    %481 = vmatpush1.msra.mxu0 0.0
    %482 = vmatprep.subr.mxu0 0.0
    %483 = vmatpush1.msra.mxu0 0.0
    %484 = vmatprep.subr.mxu0 0.0
    %485 = vmatpush1.msra.mxu0 0.0
    %486 = vmatprep.subr.mxu0 0.0
    %487 = vmatpush1.msra.mxu0 0.0
    %488 = vmatprep.mubr.f32.mxu0 0.0
    %489 = vmatmul.mubr.f32.gmra.mrb[0].mxu0 %v413
    %v490 = vpop.f32.mrb[0].mxu0
    %v491 = vadd.f32 %v402, %v490
    %v492 = vpop.f32.mrb[0].mxu0
    %493 = vmatprep.mubr.f32.mxu0 0.0
    %494 = vmatmul.mubr.f32.gmra.mrb[0].mxu0 %v415
    %v495 = vpop.f32.mrb[0].mxu0
    %v496 = vadd.f32 %v404, %v495
    %v497 = vpop.f32.mrb[0].mxu0
    %498 = vmatprep.mubr.f32.mxu0 0.0
    %499 = vmatmul.mubr.f32.gmra.mrb[0].mxu0 %v417
    %v500 = vpop.f32.mrb[0].mxu0
    %v501 = vadd.f32 %v406, %v500
    %v502 = vpop.f32.mrb[0].mxu0
    %503 = vmatprep.mubr.f32.mxu0 0.0
    %504 = vmatmul.mubr.f32.gmra.mrb[0].mxu0 %v419
    %v505 = vpop.f32.mrb[0].mxu0
    %v506 = vadd.f32 %v408, %v505
    %v507 = vpop.f32.mrb[0].mxu0
    %508 = vdwg.mxu0
    %v509 = vxor.u32 %v491, 2147483648
    %v510 = vxor.u32 %v496, 2147483648
    %v511 = vxor.u32 %v501, 2147483648
    %v512 = vxor.u32 %v506, 2147483648
    %v513 = vmul.f32 %v509, 1.442695
    %v514 = vpow.pop %v513
    %v515 = vmul.f32 %v510, 1.442695
    %v516 = vpow.pop %v515
    %v517 = vmul.f32 %v511, 1.442695
    %v518 = vpow.pop %v517
    %v519 = vmul.f32 %v512, 1.442695
    %v520 = vpow.pop %v519
    %v521 = vadd.f32 %v514, 1.0
    %v522 = vadd.f32 %v516, 1.0
    %v523 = vadd.f32 %v518, 1.0
    %v524 = vadd.f32 %v520, 1.0
    %v525 = vrcp.pop %v521
    %v526 = vmul.f32 1.0, %v525
    %v527 = vrcp.pop %v522
    %v528 = vmul.f32 1.0, %v527
    %v529 = vrcp.pop %v523
    %v530 = vmul.f32 1.0, %v529
    %v531 = vrcp.pop %v524
    %v532 = vmul.f32 1.0, %v531
    %534 = vset.pattern.permute.xlu0 0
    %535 = vperm.xlu0 %534, %v297
    %v536 = vpop.permute.xlu0 %535
    %539 = vset.pattern.permute.xlu0 0
    %540 = vperm.xlu0 %539, %v299
    %v541 = vpop.permute.xlu0 %540
    %544 = vset.pattern.permute.xlu0 0
    %545 = vperm.xlu0 %544, %v301
    %v546 = vpop.permute.xlu0 %545
    %549 = vset.pattern.permute.xlu0 0
    %550 = vperm.xlu0 %549, %v303
    %v551 = vpop.permute.xlu0 %550
    %v553 = vmul.f32 %v56, %v536
    %v554 = vmul.f32 %v57, %v536
    %v555 = vmul.f32 %v58, %v541
    %v556 = vmul.f32 %v59, %v541
    %v557 = vmul.f32 %v60, %v546
    %v558 = vmul.f32 %v61, %v546
    %v559 = vmul.f32 %v62, %v551
    %v560 = vmul.f32 %v63, %v551
    %562 = vset.pattern.permute.xlu0 0
    %563 = vperm.xlu0 %562, %v526
    %v564 = vpop.permute.xlu0 %563
    %567 = vset.pattern.permute.xlu0 0
    %568 = vperm.xlu0 %567, %v528
    %v569 = vpop.permute.xlu0 %568
    %572 = vset.pattern.permute.xlu0 0
    %573 = vperm.xlu0 %572, %v530
    %v574 = vpop.permute.xlu0 %573
    %577 = vset.pattern.permute.xlu0 0
    %578 = vperm.xlu0 %577, %v532
    %v579 = vpop.permute.xlu0 %578
    %v581 = vmul.f32 %v64, %v564
    %v582 = vmul.f32 %v65, %v564
    %v583 = vmul.f32 %v66, %v569
    %v584 = vmul.f32 %v67, %v569
    %v585 = vmul.f32 %v68, %v574
    %v586 = vmul.f32 %v69, %v574
    %v587 = vmul.f32 %v70, %v579
    %v588 = vmul.f32 %v71, %v579
    %v589 = vadd.f32 %v553, %v581
    %v590 = vadd.f32 %v554, %v582
    %v591 = vadd.f32 %v555, %v583
    %v592 = vadd.f32 %v556, %v584
    %v593 = vadd.f32 %v557, %v585
    %v594 = vadd.f32 %v558, %v586
    %v595 = vadd.f32 %v559, %v587
    %v596 = vadd.f32 %v560, %v588
    %597 = vst [vmem:[#allocation7] sm:$0xff] %v589
    %598 = vst [vmem:[#allocation7 + $0x8] sm:$0xff] %v590
    %599 = vst [vmem:[#allocation7 + $0x10] sm:$0xff] %v591
    %600 = vst [vmem:[#allocation7 + $0x18] sm:$0xff] %v592
    %601 = vst [vmem:[#allocation7 + $0x20] sm:$0xff] %v593
    %602 = vst [vmem:[#allocation7 + $0x28] sm:$0xff] %v594
    %603 = vst [vmem:[#allocation7 + $0x30] sm:$0xff] %v595
    %604 = vst [vmem:[#allocation7 + $0x38] sm:$0xff] %v596
    %s605 = scalar_lea.vmem [#allocation2], 64
    %v606 = vld [vmem:[%s605] sm:$0xff]
    %v607 = vld [vmem:[%s605 + $0x8] sm:$0xff]
    %v608 = vld [vmem:[%s605 + $0x10] sm:$0xff]
    %v609 = vld [vmem:[%s605 + $0x18] sm:$0xff]
    %v610 = vld [vmem:[%s605 + $0x20] sm:$0xff]
    %v611 = vld [vmem:[%s605 + $0x28] sm:$0xff]
    %v612 = vld [vmem:[%s605 + $0x30] sm:$0xff]
    %v613 = vld [vmem:[%s605 + $0x38] sm:$0xff]
    %s614 = scalar_lea.vmem [#allocation5], 64
    %v615 = vld [vmem:[%s614] sm:$0xff]
    %v616 = vld [vmem:[%s614 + $0x8] sm:$0xff]
    %v617 = vld [vmem:[%s614 + $0x10] sm:$0xff]
    %v618 = vld [vmem:[%s614 + $0x18] sm:$0xff]
    %v619 = vld [vmem:[%s614 + $0x20] sm:$0xff]
    %v620 = vld [vmem:[%s614 + $0x28] sm:$0xff]
    %v621 = vld [vmem:[%s614 + $0x30] sm:$0xff]
    %v622 = vld [vmem:[%s614 + $0x38] sm:$0xff]
    %v623 = vadd.f32 %v606, %v607
    %624 = vadd.xlane.f32.xlu0 %v623
    %v625 = vpop.xlane.xlu0 %624
    %v626 = vadd.f32 %v608, %v609
    %627 = vadd.xlane.f32.xlu0 %v626
    %v628 = vpop.xlane.xlu0 %627
    %v629 = vadd.f32 %v610, %v611
    %630 = vadd.xlane.f32.xlu0 %v629
    %v631 = vpop.xlane.xlu0 %630
    %v632 = vadd.f32 %v612, %v613
    %633 = vadd.xlane.f32.xlu0 %v632
    %v634 = vpop.xlane.xlu0 %633
    %v635 = vmul.f32 %v625, 0.00390625
    %v636 = vmul.f32 %v628, 0.00390625
    %v637 = vmul.f32 %v631, 0.00390625
    %v638 = vmul.f32 %v634, 0.00390625
    %639 = vmatprep.subr.mxu0 0.0
    %640 = vmatpush1.msra.mxu0 %v635
    %641 = vmatprep.subr.mxu0 0.0
    %642 = vmatpush1.msra.mxu0 %v636
    %643 = vmatprep.subr.mxu0 0.0
    %644 = vmatpush1.msra.mxu0 %v637
    %645 = vmatprep.subr.mxu0 0.0
    %646 = vmatpush1.msra.mxu0 %v638
    %647 = vmatprep.subr.mxu0 0.0
    %648 = vmatpush1.msra.mxu0 0.0
    %649 = vmatprep.subr.mxu0 0.0
    %650 = vmatpush1.msra.mxu0 0.0
    %651 = vmatprep.subr.mxu0 0.0
    %652 = vmatpush1.msra.mxu0 0.0
    %653 = vmatprep.subr.mxu0 0.0
    %654 = vmatpush1.msra.mxu0 0.0
    %655 = vmatprep.subr.mxu0 0.0
    %656 = vmatpush1.msra.mxu0 0.0
    %657 = vmatprep.subr.mxu0 0.0
    %658 = vmatpush1.msra.mxu0 0.0
    %659 = vmatprep.subr.mxu0 0.0
    %660 = vmatpush1.msra.mxu0 0.0
    %661 = vmatprep.subr.mxu0 0.0
    %662 = vmatpush1.msra.mxu0 0.0
    %663 = vmatprep.subr.mxu0 0.0
    %664 = vmatpush1.msra.mxu0 0.0
    %665 = vmatprep.subr.mxu0 0.0
    %666 = vmatpush1.msra.mxu0 0.0
    %667 = vmatprep.subr.mxu0 0.0
    %668 = vmatpush1.msra.mxu0 0.0
    %669 = vmatprep.subr.mxu0 0.0
    %670 = vmatpush1.msra.mxu0 0.0
    %671 = vmatprep.subr.mxu0 0.0
    %672 = vmatpush1.msra.mxu0 0.0
    %673 = vmatprep.subr.mxu0 0.0
    %674 = vmatpush1.msra.mxu0 0.0
    %675 = vmatprep.subr.mxu0 0.0
    %676 = vmatpush1.msra.mxu0 0.0
    %677 = vmatprep.subr.mxu0 0.0
    %678 = vmatpush1.msra.mxu0 0.0
    %679 = vmatprep.subr.mxu0 0.0
    %680 = vmatpush1.msra.mxu0 0.0
    %681 = vmatprep.subr.mxu0 0.0
    %682 = vmatpush1.msra.mxu0 0.0
    %683 = vmatprep.subr.mxu0 0.0
    %684 = vmatpush1.msra.mxu0 0.0
    %685 = vmatprep.subr.mxu0 0.0
    %686 = vmatpush1.msra.mxu0 0.0
    %687 = vmatprep.subr.mxu0 0.0
    %688 = vmatpush1.msra.mxu0 0.0
    %689 = vmatprep.subr.mxu0 0.0
    %690 = vmatpush1.msra.mxu0 0.0
    %691 = vmatprep.subr.mxu0 0.0
    %692 = vmatpush1.msra.mxu0 0.0
    %693 = vmatprep.subr.mxu0 0.0
    %694 = vmatpush1.msra.mxu0 0.0
    %695 = vmatprep.subr.mxu0 0.0
    %696 = vmatpush1.msra.mxu0 0.0
    %697 = vmatprep.subr.mxu0 0.0
    %698 = vmatpush1.msra.mxu0 0.0
    %699 = vmatprep.subr.mxu0 0.0
    %700 = vmatpush1.msra.mxu0 0.0
    %701 = vmatprep.subr.mxu0 0.0
    %702 = vmatpush1.msra.mxu0 0.0
    %703 = vmatprep.mubr.f32.mxu0 0.0
    %704 = vmatmul.mubr.f32.gmra.mrb[0].mxu0 %v93
    %v705 = vpop.f32.mrb[0].mxu0
    %v706 = vadd.f32 %v90, %v705
    %v707 = vpop.f32.mrb[0].mxu0
    %708 = vdwg.mxu0
    %v709 = vmax.f32 %v706, 0.0
    %v711 = vsel %vm191, %v709, 0
    %713 = vmatprep.subr.mxu0 0.0
    %714 = vmatpush1.msra.mxu0 %v711
    %715 = vmatprep.subr.mxu0 0.0
    %716 = vmatpush1.msra.mxu0 0.0
    %717 = vmatprep.subr.mxu0 0.0
    %718 = vmatpush1.msra.mxu0 0.0
    %719 = vmatprep.subr.mxu0 0.0
    %720 = vmatpush1.msra.mxu0 0.0
    %721 = vmatprep.subr.mxu0 0.0
    %722 = vmatpush1.msra.mxu0 0.0
    %723 = vmatprep.subr.mxu0 0.0
    %724 = vmatpush1.msra.mxu0 0.0
    %725 = vmatprep.subr.mxu0 0.0
    %726 = vmatpush1.msra.mxu0 0.0
    %727 = vmatprep.subr.mxu0 0.0
    %728 = vmatpush1.msra.mxu0 0.0
    %729 = vmatprep.subr.mxu0 0.0
    %730 = vmatpush1.msra.mxu0 0.0
    %731 = vmatprep.subr.mxu0 0.0
    %732 = vmatpush1.msra.mxu0 0.0
    %733 = vmatprep.subr.mxu0 0.0
    %734 = vmatpush1.msra.mxu0 0.0
    %735 = vmatprep.subr.mxu0 0.0
    %736 = vmatpush1.msra.mxu0 0.0
    %737 = vmatprep.subr.mxu0 0.0
    %738 = vmatpush1.msra.mxu0 0.0
    %739 = vmatprep.subr.mxu0 0.0
    %740 = vmatpush1.msra.mxu0 0.0
    %741 = vmatprep.subr.mxu0 0.0
    %742 = vmatpush1.msra.mxu0 0.0
    %743 = vmatprep.subr.mxu0 0.0
    %744 = vmatpush1.msra.mxu0 0.0
    %745 = vmatprep.subr.mxu0 0.0
    %746 = vmatpush1.msra.mxu0 0.0
    %747 = vmatprep.subr.mxu0 0.0
    %748 = vmatpush1.msra.mxu0 0.0
    %749 = vmatprep.subr.mxu0 0.0
    %750 = vmatpush1.msra.mxu0 0.0
    %751 = vmatprep.subr.mxu0 0.0
    %752 = vmatpush1.msra.mxu0 0.0
    %753 = vmatprep.subr.mxu0 0.0
    %754 = vmatpush1.msra.mxu0 0.0
    %755 = vmatprep.subr.mxu0 0.0
    %756 = vmatpush1.msra.mxu0 0.0
    %757 = vmatprep.subr.mxu0 0.0
    %758 = vmatpush1.msra.mxu0 0.0
    %759 = vmatprep.subr.mxu0 0.0
    %760 = vmatpush1.msra.mxu0 0.0
    %761 = vmatprep.subr.mxu0 0.0
    %762 = vmatpush1.msra.mxu0 0.0
    %763 = vmatprep.subr.mxu0 0.0
    %764 = vmatpush1.msra.mxu0 0.0
    %765 = vmatprep.subr.mxu0 0.0
    %766 = vmatpush1.msra.mxu0 0.0
    %767 = vmatprep.subr.mxu0 0.0
    %768 = vmatpush1.msra.mxu0 0.0
    %769 = vmatprep.subr.mxu0 0.0
    %770 = vmatpush1.msra.mxu0 0.0
    %771 = vmatprep.subr.mxu0 0.0
    %772 = vmatpush1.msra.mxu0 0.0
    %773 = vmatprep.subr.mxu0 0.0
    %774 = vmatpush1.msra.mxu0 0.0
    %775 = vmatprep.subr.mxu0 0.0
    %776 = vmatpush1.msra.mxu0 0.0
    %777 = vmatprep.mubr.f32.mxu0 0.0
    %778 = vmatmul.mubr.f32.gmra.mrb[0].mxu0 %v183
    %v779 = vpop.f32.mrb[0].mxu0
    %v780 = vadd.f32 %v171, %v779
    %v781 = vpop.f32.mrb[0].mxu0
    %782 = vmatprep.mubr.f32.mxu0 0.0
    %783 = vmatmul.mubr.f32.gmra.mrb[0].mxu0 %v185
    %v784 = vpop.f32.mrb[0].mxu0
    %v785 = vadd.f32 %v173, %v784
    %v786 = vpop.f32.mrb[0].mxu0
    %787 = vmatprep.mubr.f32.mxu0 0.0
    %788 = vmatmul.mubr.f32.gmra.mrb[0].mxu0 %v187
    %v789 = vpop.f32.mrb[0].mxu0
    %v790 = vadd.f32 %v175, %v789
    %v791 = vpop.f32.mrb[0].mxu0
    %792 = vmatprep.mubr.f32.mxu0 0.0
    %793 = vmatmul.mubr.f32.gmra.mrb[0].mxu0 %v189
    %v794 = vpop.f32.mrb[0].mxu0
    %v795 = vadd.f32 %v177, %v794
    %v796 = vpop.f32.mrb[0].mxu0
    %797 = vdwg.mxu0
    %v798 = vxor.u32 %v780, 2147483648
    %v799 = vxor.u32 %v785, 2147483648
    %v800 = vxor.u32 %v790, 2147483648
    %v801 = vxor.u32 %v795, 2147483648
    %v802 = vmul.f32 %v798, 1.442695
    %v803 = vpow.pop %v802
    %v804 = vmul.f32 %v799, 1.442695
    %v805 = vpow.pop %v804
    %v806 = vmul.f32 %v800, 1.442695
    %v807 = vpow.pop %v806
    %v808 = vmul.f32 %v801, 1.442695
    %v809 = vpow.pop %v808
    %v810 = vadd.f32 %v803, 1.0
    %v811 = vadd.f32 %v805, 1.0
    %v812 = vadd.f32 %v807, 1.0
    %v813 = vadd.f32 %v809, 1.0
    %v814 = vrcp.pop %v810
    %v815 = vmul.f32 1.0, %v814
    %v816 = vrcp.pop %v811
    %v817 = vmul.f32 1.0, %v816
    %v818 = vrcp.pop %v812
    %v819 = vmul.f32 1.0, %v818
    %v820 = vrcp.pop %v813
    %v821 = vmul.f32 1.0, %v820
    %v822 = vadd.f32 %v615, %v616
    %823 = vadd.xlane.f32.xlu0 %v822
    %v824 = vpop.xlane.xlu0 %823
    %v825 = vadd.f32 %v617, %v618
    %826 = vadd.xlane.f32.xlu0 %v825
    %v827 = vpop.xlane.xlu0 %826
    %v828 = vadd.f32 %v619, %v620
    %829 = vadd.xlane.f32.xlu0 %v828
    %v830 = vpop.xlane.xlu0 %829
    %v831 = vadd.f32 %v621, %v622
    %832 = vadd.xlane.f32.xlu0 %v831
    %v833 = vpop.xlane.xlu0 %832
    %v834 = vmul.f32 %v824, 0.00390625
    %v835 = vmul.f32 %v827, 0.00390625
    %v836 = vmul.f32 %v830, 0.00390625
    %v837 = vmul.f32 %v833, 0.00390625
    %838 = vmatprep.subr.mxu0 0.0
    %839 = vmatpush1.msra.mxu0 %v834
    %840 = vmatprep.subr.mxu0 0.0
    %841 = vmatpush1.msra.mxu0 %v835
    %842 = vmatprep.subr.mxu0 0.0
    %843 = vmatpush1.msra.mxu0 %v836
    %844 = vmatprep.subr.mxu0 0.0
    %845 = vmatpush1.msra.mxu0 %v837
    %846 = vmatprep.subr.mxu0 0.0
    %847 = vmatpush1.msra.mxu0 0.0
    %848 = vmatprep.subr.mxu0 0.0
    %849 = vmatpush1.msra.mxu0 0.0
    %850 = vmatprep.subr.mxu0 0.0
    %851 = vmatpush1.msra.mxu0 0.0
    %852 = vmatprep.subr.mxu0 0.0
    %853 = vmatpush1.msra.mxu0 0.0
    %854 = vmatprep.subr.mxu0 0.0
    %855 = vmatpush1.msra.mxu0 0.0
    %856 = vmatprep.subr.mxu0 0.0
    %857 = vmatpush1.msra.mxu0 0.0
    %858 = vmatprep.subr.mxu0 0.0
    %859 = vmatpush1.msra.mxu0 0.0
    %860 = vmatprep.subr.mxu0 0.0
    %861 = vmatpush1.msra.mxu0 0.0
    %862 = vmatprep.subr.mxu0 0.0
    %863 = vmatpush1.msra.mxu0 0.0
    %864 = vmatprep.subr.mxu0 0.0
    %865 = vmatpush1.msra.mxu0 0.0
    %866 = vmatprep.subr.mxu0 0.0
    %867 = vmatpush1.msra.mxu0 0.0
    %868 = vmatprep.subr.mxu0 0.0
    %869 = vmatpush1.msra.mxu0 0.0
    %870 = vmatprep.subr.mxu0 0.0
    %871 = vmatpush1.msra.mxu0 0.0
    %872 = vmatprep.subr.mxu0 0.0
    %873 = vmatpush1.msra.mxu0 0.0
    %874 = vmatprep.subr.mxu0 0.0
    %875 = vmatpush1.msra.mxu0 0.0
    %876 = vmatprep.subr.mxu0 0.0
    %877 = vmatpush1.msra.mxu0 0.0
    %878 = vmatprep.subr.mxu0 0.0
    %879 = vmatpush1.msra.mxu0 0.0
    %880 = vmatprep.subr.mxu0 0.0
    %881 = vmatpush1.msra.mxu0 0.0
    %882 = vmatprep.subr.mxu0 0.0
    %883 = vmatpush1.msra.mxu0 0.0
    %884 = vmatprep.subr.mxu0 0.0
    %885 = vmatpush1.msra.mxu0 0.0
    %886 = vmatprep.subr.mxu0 0.0
    %887 = vmatpush1.msra.mxu0 0.0
    %888 = vmatprep.subr.mxu0 0.0
    %889 = vmatpush1.msra.mxu0 0.0
    %890 = vmatprep.subr.mxu0 0.0
    %891 = vmatpush1.msra.mxu0 0.0
    %892 = vmatprep.subr.mxu0 0.0
    %893 = vmatpush1.msra.mxu0 0.0
    %894 = vmatprep.subr.mxu0 0.0
    %895 = vmatpush1.msra.mxu0 0.0
    %896 = vmatprep.subr.mxu0 0.0
    %897 = vmatpush1.msra.mxu0 0.0
    %898 = vmatprep.subr.mxu0 0.0
    %899 = vmatpush1.msra.mxu0 0.0
    %900 = vmatprep.subr.mxu0 0.0
    %901 = vmatpush1.msra.mxu0 0.0
    %902 = vmatprep.mubr.f32.mxu0 0.0
    %903 = vmatmul.mubr.f32.gmra.mrb[0].mxu0 %v324
    %v904 = vpop.f32.mrb[0].mxu0
    %v905 = vadd.f32 %v322, %v904
    %v906 = vpop.f32.mrb[0].mxu0
    %907 = vdwg.mxu0
    %v908 = vmax.f32 %v905, 0.0
    %v910 = vsel %vm191, %v908, 0
    %912 = vmatprep.subr.mxu0 0.0
    %913 = vmatpush1.msra.mxu0 %v910
    %914 = vmatprep.subr.mxu0 0.0
    %915 = vmatpush1.msra.mxu0 0.0
    %916 = vmatprep.subr.mxu0 0.0
    %917 = vmatpush1.msra.mxu0 0.0
    %918 = vmatprep.subr.mxu0 0.0
    %919 = vmatpush1.msra.mxu0 0.0
    %920 = vmatprep.subr.mxu0 0.0
    %921 = vmatpush1.msra.mxu0 0.0
    %922 = vmatprep.subr.mxu0 0.0
    %923 = vmatpush1.msra.mxu0 0.0
    %924 = vmatprep.subr.mxu0 0.0
    %925 = vmatpush1.msra.mxu0 0.0
    %926 = vmatprep.subr.mxu0 0.0
    %927 = vmatpush1.msra.mxu0 0.0
    %928 = vmatprep.subr.mxu0 0.0
    %929 = vmatpush1.msra.mxu0 0.0
    %930 = vmatprep.subr.mxu0 0.0
    %931 = vmatpush1.msra.mxu0 0.0
    %932 = vmatprep.subr.mxu0 0.0
    %933 = vmatpush1.msra.mxu0 0.0
    %934 = vmatprep.subr.mxu0 0.0
    %935 = vmatpush1.msra.mxu0 0.0
    %936 = vmatprep.subr.mxu0 0.0
    %937 = vmatpush1.msra.mxu0 0.0
    %938 = vmatprep.subr.mxu0 0.0
    %939 = vmatpush1.msra.mxu0 0.0
    %940 = vmatprep.subr.mxu0 0.0
    %941 = vmatpush1.msra.mxu0 0.0
    %942 = vmatprep.subr.mxu0 0.0
    %943 = vmatpush1.msra.mxu0 0.0
    %944 = vmatprep.subr.mxu0 0.0
    %945 = vmatpush1.msra.mxu0 0.0
    %946 = vmatprep.subr.mxu0 0.0
    %947 = vmatpush1.msra.mxu0 0.0
    %948 = vmatprep.subr.mxu0 0.0
    %949 = vmatpush1.msra.mxu0 0.0
    %950 = vmatprep.subr.mxu0 0.0
    %951 = vmatpush1.msra.mxu0 0.0
    %952 = vmatprep.subr.mxu0 0.0
    %953 = vmatpush1.msra.mxu0 0.0
    %954 = vmatprep.subr.mxu0 0.0
    %955 = vmatpush1.msra.mxu0 0.0
    %956 = vmatprep.subr.mxu0 0.0
    %957 = vmatpush1.msra.mxu0 0.0
    %958 = vmatprep.subr.mxu0 0.0
    %959 = vmatpush1.msra.mxu0 0.0
    %960 = vmatprep.subr.mxu0 0.0
    %961 = vmatpush1.msra.mxu0 0.0
    %962 = vmatprep.subr.mxu0 0.0
    %963 = vmatpush1.msra.mxu0 0.0
    %964 = vmatprep.subr.mxu0 0.0
    %965 = vmatpush1.msra.mxu0 0.0
    %966 = vmatprep.subr.mxu0 0.0
    %967 = vmatpush1.msra.mxu0 0.0
    %968 = vmatprep.subr.mxu0 0.0
    %969 = vmatpush1.msra.mxu0 0.0
    %970 = vmatprep.subr.mxu0 0.0
    %971 = vmatpush1.msra.mxu0 0.0
    %972 = vmatprep.subr.mxu0 0.0
    %973 = vmatpush1.msra.mxu0 0.0
    %974 = vmatprep.subr.mxu0 0.0
    %975 = vmatpush1.msra.mxu0 0.0
    %976 = vmatprep.mubr.f32.mxu0 0.0
    %977 = vmatmul.mubr.f32.gmra.mrb[0].mxu0 %v413
    %v978 = vpop.f32.mrb[0].mxu0
    %v979 = vadd.f32 %v402, %v978
    %v980 = vpop.f32.mrb[0].mxu0
    %981 = vmatprep.mubr.f32.mxu0 0.0
    %982 = vmatmul.mubr.f32.gmra.mrb[0].mxu0 %v415
    %v983 = vpop.f32.mrb[0].mxu0
    %v984 = vadd.f32 %v404, %v983
    %v985 = vpop.f32.mrb[0].mxu0
    %986 = vmatprep.mubr.f32.mxu0 0.0
    %987 = vmatmul.mubr.f32.gmra.mrb[0].mxu0 %v417
    %v988 = vpop.f32.mrb[0].mxu0
    %v989 = vadd.f32 %v406, %v988
    %v990 = vpop.f32.mrb[0].mxu0
    %991 = vmatprep.mubr.f32.mxu0 0.0
    %992 = vmatmul.mubr.f32.gmra.mrb[0].mxu0 %v419
    %v993 = vpop.f32.mrb[0].mxu0
    %v994 = vadd.f32 %v408, %v993
    %v995 = vpop.f32.mrb[0].mxu0
    %996 = vdwg.mxu0
    %v997 = vxor.u32 %v979, 2147483648
    %v998 = vxor.u32 %v984, 2147483648
    %v999 = vxor.u32 %v989, 2147483648
    %v1000 = vxor.u32 %v994, 2147483648
    %v1001 = vmul.f32 %v997, 1.442695
    %v1002 = vpow.pop %v1001
    %v1003 = vmul.f32 %v998, 1.442695
    %v1004 = vpow.pop %v1003
    %v1005 = vmul.f32 %v999, 1.442695
    %v1006 = vpow.pop %v1005
    %v1007 = vmul.f32 %v1000, 1.442695
    %v1008 = vpow.pop %v1007
    %v1009 = vadd.f32 %v1002, 1.0
    %v1010 = vadd.f32 %v1004, 1.0
    %v1011 = vadd.f32 %v1006, 1.0
    %v1012 = vadd.f32 %v1008, 1.0
    %v1013 = vrcp.pop %v1009
    %v1014 = vmul.f32 1.0, %v1013
    %v1015 = vrcp.pop %v1010
    %v1016 = vmul.f32 1.0, %v1015
    %v1017 = vrcp.pop %v1011
    %v1018 = vmul.f32 1.0, %v1017
    %v1019 = vrcp.pop %v1012
    %v1020 = vmul.f32 1.0, %v1019
    %1022 = vset.pattern.permute.xlu0 0
    %1023 = vperm.xlu0 %1022, %v815
    %v1024 = vpop.permute.xlu0 %1023
    %1027 = vset.pattern.permute.xlu0 0
    %1028 = vperm.xlu0 %1027, %v817
    %v1029 = vpop.permute.xlu0 %1028
    %1032 = vset.pattern.permute.xlu0 0
    %1033 = vperm.xlu0 %1032, %v819
    %v1034 = vpop.permute.xlu0 %1033
    %1037 = vset.pattern.permute.xlu0 0
    %1038 = vperm.xlu0 %1037, %v821
    %v1039 = vpop.permute.xlu0 %1038
    %v1041 = vmul.f32 %v606, %v1024
    %v1042 = vmul.f32 %v607, %v1024
    %v1043 = vmul.f32 %v608, %v1029
    %v1044 = vmul.f32 %v609, %v1029
    %v1045 = vmul.f32 %v610, %v1034
    %v1046 = vmul.f32 %v611, %v1034
    %v1047 = vmul.f32 %v612, %v1039
    %v1048 = vmul.f32 %v613, %v1039
    %1050 = vset.pattern.permute.xlu0 0
    %1051 = vperm.xlu0 %1050, %v1014
    %v1052 = vpop.permute.xlu0 %1051
    %1055 = vset.pattern.permute.xlu0 0
    %1056 = vperm.xlu0 %1055, %v1016
    %v1057 = vpop.permute.xlu0 %1056
    %1060 = vset.pattern.permute.xlu0 0
    %1061 = vperm.xlu0 %1060, %v1018
    %v1062 = vpop.permute.xlu0 %1061
    %1065 = vset.pattern.permute.xlu0 0
    %1066 = vperm.xlu0 %1065, %v1020
    %v1067 = vpop.permute.xlu0 %1066
    %v1069 = vmul.f32 %v615, %v1052
    %v1070 = vmul.f32 %v616, %v1052
    %v1071 = vmul.f32 %v617, %v1057
    %v1072 = vmul.f32 %v618, %v1057
    %v1073 = vmul.f32 %v619, %v1062
    %v1074 = vmul.f32 %v620, %v1062
    %v1075 = vmul.f32 %v621, %v1067
    %v1076 = vmul.f32 %v622, %v1067
    %v1077 = vadd.f32 %v1041, %v1069
    %v1078 = vadd.f32 %v1042, %v1070
    %v1079 = vadd.f32 %v1043, %v1071
    %v1080 = vadd.f32 %v1044, %v1072
    %v1081 = vadd.f32 %v1045, %v1073
    %v1082 = vadd.f32 %v1046, %v1074
    %v1083 = vadd.f32 %v1047, %v1075
    %v1084 = vadd.f32 %v1048, %v1076
    %s1085 = scalar_lea.vmem [#allocation7], 64
    %1086 = vst [vmem:[%s1085] sm:$0xff] %v1077
    %1087 = vst [vmem:[%s1085 + $0x8] sm:$0xff] %v1078
    %1088 = vst [vmem:[%s1085 + $0x10] sm:$0xff] %v1079
    %1089 = vst [vmem:[%s1085 + $0x18] sm:$0xff] %v1080
    %1090 = vst [vmem:[%s1085 + $0x20] sm:$0xff] %v1081
    %1091 = vst [vmem:[%s1085 + $0x28] sm:$0xff] %v1082
    %1092 = vst [vmem:[%s1085 + $0x30] sm:$0xff] %v1083
    %1093 = vst [vmem:[%s1085 + $0x38] sm:$0xff] %v1084
    // Predicated region
    $region26: #{tpu_custom_call.1} parent=1 // pred_check
      _
    $region27: #{tpu_custom_call.1} parent=1 // pred_check_branch
      %1095 = sbr.rel (0) target = $region29
    $region28: #{tpu_custom_call.1} parent=1 // pred_region
      %s1097 = ssub.s32 2048, 2048
      %1098 = vsyncadd [#allocation4], %s1097
      %s1099 = sshll.u32 [#allocation7], 4
      %s1100 = int_to_ptr.vmem [resolvable:$true] %s1099
      %1105 = dma.vmem_to_hbm [thread:$0]  %s1100, 2048, %s4, [#allocation4], 256, 256, 16
    $region29: #{tpu_custom_call.1} parent=1 // pred_fallthru
      _
    // Predicated region
    $region30: #{tpu_custom_call.1} parent=1 // pred_check
      _
    $region31: #{tpu_custom_call.1} parent=1 // pred_check_branch
      %1107 = sbr.rel (0) target = $region33
    $region32: #{tpu_custom_call.1} parent=1 // pred_region
      %1108 = dma.done [#allocation4], 2048
    $region33: #{tpu_custom_call.1} parent=1 // pred_fallthru
      _
    %1109 = vsyncpa [#allocation3], 1
    %1110 = vsyncpa [#allocation6], 1
    %1111 = vsyncpa [#allocation4], 1

</llo_original>
